<compile_context>
chip_gen: v5e
topology: v5e:2x2
jax: 0.10.0
libtpu: 0.0.40
codegen_flags: <defaults>
</compile_context>

<pallas_src>
import jax
import jax.numpy as jnp
from jax.experimental import pallas as pl
from jax.experimental.pallas import tpu as pltpu


def dot_interaction(dense_feature, sparse_features, self_interaction: bool = True):
    b, d = dense_feature.shape
    itemsize = jnp.dtype(dense_feature.dtype).itemsize

    # Build the list of D-wide feature chunks WITHOUT materializing a big
    # concatenated array in HBM (the common DLRM case: every feature is (B, D)).
    if all(s.shape[1] % d == 0 for s in sparse_features):
        chunks = [dense_feature]
        for s in sparse_features:
            nk = s.shape[1] // d
            if nk == 1:
                chunks.append(s)
            else:
                chunks.extend(s[:, k * d:(k + 1) * d] for k in range(nk))
    else:
        # Rare fallback: chunk boundaries cross feature boundaries, mirror the
        # torch `.view(B, -1, D)` exactly via an explicit concat + split.
        cat = jnp.concatenate([dense_feature] + list(sparse_features), axis=1)
        chunks = [cat[:, k * d:(k + 1) * d] for k in range(cat.shape[1] // d)]

    f = len(chunks)
    tril_offset = 0 if self_interaction else -1
    # Row-major lower-triangle pairs, identical ordering to torch.tril_indices.
    pairs = [(i, j) for i in range(f) for j in range(i + 1 + tril_offset)]
    p = len(pairs)
    if p == 0:  # degenerate: nothing to interact
        return dense_feature

    out_w = d + p

    # ---- batch-tile size: keep (inputs + output) block bytes ~<= 3 MiB so the
    # double-buffered footprint stays well under v5e's 16 MiB scoped default.
    budget = 3 * 1024 * 1024
    per_row = (f * d + out_w) * itemsize
    tb = max(1, budget // per_row)
    if tb >= b:
        tb = b                      # single (possibly sublane-ragged) block == full dim
    else:
        tb = max(8, (tb // 8) * 8)  # sublane-aligned partial blocks
        tb = min(tb, 1024)
    grid = (pl.cdiv(b, tb),)

    def kernel(*refs):
        chunk_refs = refs[:f]
        out_ref = refs[f]
        feats = [r[...].astype(jnp.float32) for r in chunk_refs]
        cols = []
        for (fi, fj) in pairs:  # static unrolled lower-triangle pairs
            prod = feats[fi] * feats[fj]                       # VPU
            cols.append(jnp.sum(prod, axis=-1, keepdims=True))  # D-axis reduce
        tri = jnp.concatenate(cols, axis=-1).astype(out_ref.dtype)   # (TB, P)
        # Fused final output: [dense | tri] written as one lane-dense slab.
        out_ref[...] = jnp.concatenate(
            [chunk_refs[0][...].astype(out_ref.dtype), tri], axis=-1)

    cost = pl.CostEstimate(
        flops=2 * b * p * d,
        transcendentals=0,
        bytes_accessed=(b * f * d + b * out_w) * itemsize,
    )

    return pl.pallas_call(
        kernel,
        out_shape=jax.ShapeDtypeStruct((b, out_w), dense_feature.dtype),
        grid=grid,
        in_specs=[pl.BlockSpec((tb, d), lambda i: (i, 0)) for _ in range(f)],
        out_specs=pl.BlockSpec((tb, out_w), lambda i: (i, 0)),
        compiler_params=pltpu.CompilerParams(
            dimension_semantics=("parallel",)),
        cost_estimate=cost,
    )(*chunks)


if __name__ == "__main__":
    key = jax.random.PRNGKey(0)
    B, D, NUM_SPARSE = 2, 32, 3  # F = 1 + 3 = 4 features
    keys = jax.random.split(key, NUM_SPARSE + 1)
    dense = jax.random.normal(keys[0], (B, D), dtype=jnp.float32)
    sparse = [jax.random.normal(k, (B, D), dtype=jnp.float32) for k in keys[1:]]

    run = jax.jit(lambda dn, sp: dot_interaction(dn, sp, True))
    out = jax.block_until_ready(run(dense, sparse))

    run_no_self = jax.jit(lambda dn, sp: dot_interaction(dn, sp, False))
    out_ns = jax.block_until_ready(run_no_self(dense, sparse))

    # Pure-JAX reference of the forward semantics.
    cat_ref = jnp.concatenate([dense] + sparse, axis=1).reshape(B, -1, D)
    f = cat_ref.shape[1]
    inter_ref = jnp.einsum("bfd,bgd->bfg", cat_ref, cat_ref)

    i0, j0 = jnp.tril_indices(f, k=0)
    ref = jnp.concatenate([dense, inter_ref[:, i0, j0]], axis=1)
    assert out.shape == (B, D + (f * (f + 1)) // 2), out.shape
    assert jnp.allclose(out, ref, atol=1e-5, rtol=1e-5)

    i1, j1 = jnp.tril_indices(f, k=-1)
    ref_ns = jnp.concatenate([dense, inter_ref[:, i1, j1]], axis=1)
    assert out_ns.shape == (B, D + (f * (f - 1)) // 2), out_ns.shape
    assert jnp.allclose(out_ns, ref_ns, atol=1e-5, rtol=1e-5)

    print("KERNEL_OK")
</pallas_src>

<mosaic_0001>
module attributes {stable_mosaic.version = 11 : i64} {
  func.func @kernel(%arg0: i32, %arg1: memref<2x32xf32, #tpu.memory_space<vmem>>, %arg2: memref<2x32xf32, #tpu.memory_space<vmem>>, %arg3: memref<2x32xf32, #tpu.memory_space<vmem>>, %arg4: memref<2x32xf32, #tpu.memory_space<vmem>>, %arg5: memref<2x42xf32, #tpu.memory_space<vmem>>) attributes {dimension_semantics = [#tpu.dimension_semantics<parallel>], iteration_bounds = array<i64: 1>, scalar_prefetch = 0 : i64, scratch_operands = 0 : i64, tpu.core_type = #tpu.core_type<tc>, window_params = [{transform_indices = @transform_0, window_bounds = array<i64: 2, 32>}, {transform_indices = @transform_1, window_bounds = array<i64: 2, 32>}, {transform_indices = @transform_2, window_bounds = array<i64: 2, 32>}, {transform_indices = @transform_3, window_bounds = array<i64: 2, 32>}, {transform_indices = @transform_4, window_bounds = array<i64: 2, 42>}]} {
    %c0 = arith.constant 0 : index
    %c0_0 = arith.constant 0 : index
    %0 = vector.load %arg1[%c0, %c0_0] : memref<2x32xf32, #tpu.memory_space<vmem>>, vector<2x32xf32>
    %c0_1 = arith.constant 0 : index
    %c0_2 = arith.constant 0 : index
    %1 = vector.load %arg2[%c0_1, %c0_2] : memref<2x32xf32, #tpu.memory_space<vmem>>, vector<2x32xf32>
    %c0_3 = arith.constant 0 : index
    %c0_4 = arith.constant 0 : index
    %2 = vector.load %arg3[%c0_3, %c0_4] : memref<2x32xf32, #tpu.memory_space<vmem>>, vector<2x32xf32>
    %c0_5 = arith.constant 0 : index
    %c0_6 = arith.constant 0 : index
    %3 = vector.load %arg4[%c0_5, %c0_6] : memref<2x32xf32, #tpu.memory_space<vmem>>, vector<2x32xf32>
    %4 = arith.mulf %0, %0 : vector<2x32xf32>
    %cst = arith.constant dense<0.000000e+00> : vector<2xf32>
    %5 = vector.multi_reduction <add>, %4, %cst [1] : vector<2x32xf32> to vector<2xf32>
    %6 = vector.shape_cast %5 : vector<2xf32> to vector<2x1xf32>
    %7 = arith.mulf %1, %0 : vector<2x32xf32>
    %cst_7 = arith.constant dense<0.000000e+00> : vector<2xf32>
    %8 = vector.multi_reduction <add>, %7, %cst_7 [1] : vector<2x32xf32> to vector<2xf32>
    %9 = vector.shape_cast %8 : vector<2xf32> to vector<2x1xf32>
    %10 = arith.mulf %1, %1 : vector<2x32xf32>
    %cst_8 = arith.constant dense<0.000000e+00> : vector<2xf32>
    %11 = vector.multi_reduction <add>, %10, %cst_8 [1] : vector<2x32xf32> to vector<2xf32>
    %12 = vector.shape_cast %11 : vector<2xf32> to vector<2x1xf32>
    %13 = arith.mulf %2, %0 : vector<2x32xf32>
    %cst_9 = arith.constant dense<0.000000e+00> : vector<2xf32>
    %14 = vector.multi_reduction <add>, %13, %cst_9 [1] : vector<2x32xf32> to vector<2xf32>
    %15 = vector.shape_cast %14 : vector<2xf32> to vector<2x1xf32>
    %16 = arith.mulf %2, %1 : vector<2x32xf32>
    %cst_10 = arith.constant dense<0.000000e+00> : vector<2xf32>
    %17 = vector.multi_reduction <add>, %16, %cst_10 [1] : vector<2x32xf32> to vector<2xf32>
    %18 = vector.shape_cast %17 : vector<2xf32> to vector<2x1xf32>
    %19 = arith.mulf %2, %2 : vector<2x32xf32>
    %cst_11 = arith.constant dense<0.000000e+00> : vector<2xf32>
    %20 = vector.multi_reduction <add>, %19, %cst_11 [1] : vector<2x32xf32> to vector<2xf32>
    %21 = vector.shape_cast %20 : vector<2xf32> to vector<2x1xf32>
    %22 = arith.mulf %3, %0 : vector<2x32xf32>
    %cst_12 = arith.constant dense<0.000000e+00> : vector<2xf32>
    %23 = vector.multi_reduction <add>, %22, %cst_12 [1] : vector<2x32xf32> to vector<2xf32>
    %24 = vector.shape_cast %23 : vector<2xf32> to vector<2x1xf32>
    %25 = arith.mulf %3, %1 : vector<2x32xf32>
    %cst_13 = arith.constant dense<0.000000e+00> : vector<2xf32>
    %26 = vector.multi_reduction <add>, %25, %cst_13 [1] : vector<2x32xf32> to vector<2xf32>
    %27 = vector.shape_cast %26 : vector<2xf32> to vector<2x1xf32>
    %28 = arith.mulf %3, %2 : vector<2x32xf32>
    %cst_14 = arith.constant dense<0.000000e+00> : vector<2xf32>
    %29 = vector.multi_reduction <add>, %28, %cst_14 [1] : vector<2x32xf32> to vector<2xf32>
    %30 = vector.shape_cast %29 : vector<2xf32> to vector<2x1xf32>
    %31 = arith.mulf %3, %3 : vector<2x32xf32>
    %cst_15 = arith.constant dense<0.000000e+00> : vector<2xf32>
    %32 = vector.multi_reduction <add>, %31, %cst_15 [1] : vector<2x32xf32> to vector<2xf32>
    %33 = vector.shape_cast %32 : vector<2xf32> to vector<2x1xf32>
    %34 = tpu.concatenate %6, %9, %12, %15, %18, %21, %24, %27, %30, %33 in 1 : vector<2x1xf32>, vector<2x1xf32>, vector<2x1xf32>, vector<2x1xf32>, vector<2x1xf32>, vector<2x1xf32>, vector<2x1xf32>, vector<2x1xf32>, vector<2x1xf32>, vector<2x1xf32> -> vector<2x10xf32>
    %c0_16 = arith.constant 0 : index
    %c0_17 = arith.constant 0 : index
    %35 = vector.load %arg1[%c0_16, %c0_17] : memref<2x32xf32, #tpu.memory_space<vmem>>, vector<2x32xf32>
    %36 = tpu.concatenate %35, %34 in 1 : vector<2x32xf32>, vector<2x10xf32> -> vector<2x42xf32>
    %c0_18 = arith.constant 0 : index
    %c0_19 = arith.constant 0 : index
    %37 = vector.load %arg5[%c0_18, %c0_19] : memref<2x42xf32, #tpu.memory_space<vmem>>, vector<2x42xf32>
    tpu.vector_store %arg5[%c0_18, %c0_19], %36 {strides = array<i32>} : memref<2x42xf32, #tpu.memory_space<vmem>>, vector<2x42xf32>,
    return
  }
  func.func @transform_0(%arg0: i32) -> (i32, i32) {
    %c0_i32 = arith.constant 0 : i32
    %c0_i32_0 = arith.constant 0 : i32
    return %arg0, %c0_i32 : i32, i32
  }
  func.func @transform_1(%arg0: i32) -> (i32, i32) {
    %c0_i32 = arith.constant 0 : i32
    %c0_i32_0 = arith.constant 0 : i32
    return %arg0, %c0_i32 : i32, i32
  }
  func.func @transform_2(%arg0: i32) -> (i32, i32) {
    %c0_i32 = arith.constant 0 : i32
    %c0_i32_0 = arith.constant 0 : i32
    return %arg0, %c0_i32 : i32, i32
  }
  func.func @transform_3(%arg0: i32) -> (i32, i32) {
    %c0_i32 = arith.constant 0 : i32
    %c0_i32_0 = arith.constant 0 : i32
    return %arg0, %c0_i32 : i32, i32
  }
  func.func @transform_4(%arg0: i32) -> (i32, i32) {
    %c0_i32 = arith.constant 0 : i32
    %c0_i32_0 = arith.constant 0 : i32
    return %arg0, %c0_i32 : i32, i32
  }
}

</mosaic_0001>

<llo_original>
// kernel: _lambda_.1
$region0: #{_lambda_.1}
  #allocation0 [shape = 'u32[]', space=smem, size = 0x4, offset = 0x4, fixed_abs, tag = 'smem constant byte address 0x4 - core index']
  #allocation1 [shape = 'u32[72,128]{1,0:T(1,128)}', space=vmem, size = 0x9000, scoped, tag = 'internal scratch']
  %s0 = inlined_call_operand.hbm [shape: f32[2,32], index: 0, kind: input, shape index: {}]
  %s1 = inlined_call_operand.hbm [shape: f32[2,32], index: 1, kind: input, shape index: {}]
  %s2 = inlined_call_operand.hbm [shape: f32[2,32], index: 2, kind: input, shape index: {}]
  %s3 = inlined_call_operand.vmem [shape: f32[2,32], index: 3, kind: input, shape index: {}]
  %s4 = inlined_call_operand.hbm [shape: f32[2,42], index: 4, kind: output, shape index: {}]
  %s5 = sld [smem:[#allocation0]]
  $region38: #{_lambda_.1} parent=0
    _
  %s7 = ssub.s32 1, %s5
  %s8 = scalar_select 0, %s7, %s5
  $region1: #{_lambda_.1} parent=0
    #allocation2 [shape = 'u8[1024]{0}', space=vmem, size = 0x400, scoped, tag = 'input window, operand 0, single buffered']
    #allocation3 [shape = 's32[1]{0}', space=sflag, size = 0x4, scoped, tag = 'scoped memory for _lambda_.1']
    #allocation4 [shape = 's32[1]{0}', space=sflag, size = 0x4, scoped, tag = 'scoped memory for _lambda_.1']
    #allocation5 [shape = 'u8[1024]{0}', space=vmem, size = 0x400, scoped, tag = 'input window, operand 1, single buffered']
    #allocation6 [shape = 's32[1]{0}', space=sflag, size = 0x4, scoped, tag = 'scoped memory for _lambda_.1']
    #allocation7 [shape = 'u8[1024]{0}', space=vmem, size = 0x400, scoped, tag = 'input window, operand 2, single buffered']
    #allocation8 [shape = 'u8[1024]{0}', space=vmem, size = 0x400, scoped, tag = 'output window, operand 0, single buffered']
    %9 = vsyncpa [#allocation3], 0
    %10 = vsyncpa [#allocation6], 0
    %11 = vsyncpa [#allocation4], 0
    // Predicated region
    $region2: #{_lambda_.1} parent=1 // pred_check
      _
    $region3: #{_lambda_.1} parent=1 // pred_check_branch
      %13 = sbr.rel (0) target = $region5
    $region4: #{_lambda_.1} parent=1 // pred_region
      %15 = vsyncadd [#allocation3], 0
      %s17 = sshll.u32 %s0, 4
      %s18 = int_to_ptr.hbm [resolvable:$true] %s17
      %s19 = sshll.u32 [#allocation2], 4
      %s20 = int_to_ptr.vmem [resolvable:$true] %s19
      %22 = dma.hbm_to_vmem [thread:$0]  %s18, 32, %s20, [#allocation3]
    $region5: #{_lambda_.1} parent=1 // pred_fallthru
      _
    // Predicated region
    $region6: #{_lambda_.1} parent=1 // pred_check
      _
    $region7: #{_lambda_.1} parent=1 // pred_check_branch
      %24 = sbr.rel (0) target = $region9
    $region8: #{_lambda_.1} parent=1 // pred_region
      %26 = vsyncadd [#allocation6], 0
      %s28 = sshll.u32 %s1, 4
      %s29 = int_to_ptr.hbm [resolvable:$true] %s28
      %s30 = sshll.u32 [#allocation5], 4
      %s31 = int_to_ptr.vmem [resolvable:$true] %s30
      %33 = dma.hbm_to_vmem [thread:$0]  %s29, 32, %s31, [#allocation6]
    $region9: #{_lambda_.1} parent=1 // pred_fallthru
      _
    // Predicated region
    $region10: #{_lambda_.1} parent=1 // pred_check
      _
    $region11: #{_lambda_.1} parent=1 // pred_check_branch
      %35 = sbr.rel (0) target = $region13
    $region12: #{_lambda_.1} parent=1 // pred_region
      %37 = vsyncadd [#allocation6], 0
      %s39 = sshll.u32 %s2, 4
      %s40 = int_to_ptr.hbm [resolvable:$true] %s39
      %s41 = sshll.u32 [#allocation7], 4
      %s42 = int_to_ptr.vmem [resolvable:$true] %s41
      %44 = dma.hbm_to_vmem [thread:$0]  %s40, 32, %s42, [#allocation6]
    $region13: #{_lambda_.1} parent=1 // pred_fallthru
      _
    // Predicated region
    $region14: #{_lambda_.1} parent=1 // pred_check
      _
    $region15: #{_lambda_.1} parent=1 // pred_check_branch
      %46 = sbr.rel (0) target = $region17
    $region16: #{_lambda_.1} parent=1 // pred_region
      _
    $region17: #{_lambda_.1} parent=1 // pred_fallthru
      _
    // Predicated region
    $region18: #{_lambda_.1} parent=1 // pred_check
      _
    $region19: #{_lambda_.1} parent=1 // pred_check_branch
      %48 = sbr.rel (0) target = $region21
    $region20: #{_lambda_.1} parent=1 // pred_region
      %50 = dma.done [#allocation3], 32
    $region21: #{_lambda_.1} parent=1 // pred_fallthru
      _
    // Predicated region
    $region22: #{_lambda_.1} parent=1 // pred_check
      _
    $region23: #{_lambda_.1} parent=1 // pred_check_branch
      %52 = sbr.rel (0) target = $region25
    $region24: #{_lambda_.1} parent=1 // pred_region
      %54 = dma.done [#allocation6], 32
    $region25: #{_lambda_.1} parent=1 // pred_fallthru
      _
    // Predicated region
    $region26: #{_lambda_.1} parent=1 // pred_check
      _
    $region27: #{_lambda_.1} parent=1 // pred_check_branch
      %56 = sbr.rel (0) target = $region29
    $region28: #{_lambda_.1} parent=1 // pred_region
      %58 = dma.done [#allocation6], 32
    $region29: #{_lambda_.1} parent=1 // pred_fallthru
      _
    %v59 = vld [vmem:[#allocation2] sm:$0x3]
    %v60 = vld [vmem:[#allocation5] sm:$0x3]
    %v61 = vld [vmem:[#allocation7] sm:$0x3]
    %v62 = vld [vmem:[%s3] sm:$0x3]
    %v63 = vmul.f32 %v59, %v59
    %vm64 = vcmask 254976
    %v65 = vsel %vm64, %v63, 0.0
    %66 = vadd.xlane.f32.xlu0 %v65
    %v67 = vpop.xlane.xlu0 %66
    %v68 = vmul.f32 %v60, %v59
    %v69 = vsel %vm64, %v68, 0.0
    %70 = vadd.xlane.f32.xlu0 %v69
    %v71 = vpop.xlane.xlu0 %70
    %v72 = vmul.f32 %v60, %v60
    %v73 = vsel %vm64, %v72, 0.0
    %74 = vadd.xlane.f32.xlu0 %v73
    %v75 = vpop.xlane.xlu0 %74
    %v76 = vmul.f32 %v61, %v59
    %v77 = vsel %vm64, %v76, 0.0
    %78 = vadd.xlane.f32.xlu0 %v77
    %v79 = vpop.xlane.xlu0 %78
    %v80 = vmul.f32 %v61, %v60
    %v81 = vsel %vm64, %v80, 0.0
    %82 = vadd.xlane.f32.xlu0 %v81
    %v83 = vpop.xlane.xlu0 %82
    %v84 = vmul.f32 %v61, %v61
    %v85 = vsel %vm64, %v84, 0.0
    %86 = vadd.xlane.f32.xlu0 %v85
    %v87 = vpop.xlane.xlu0 %86
    %v88 = vmul.f32 %v62, %v59
    %v89 = vsel %vm64, %v88, 0.0
    %90 = vadd.xlane.f32.xlu0 %v89
    %v91 = vpop.xlane.xlu0 %90
    %v92 = vmul.f32 %v62, %v60
    %v93 = vsel %vm64, %v92, 0.0
    %94 = vadd.xlane.f32.xlu0 %v93
    %v95 = vpop.xlane.xlu0 %94
    %v96 = vmul.f32 %v62, %v61
    %v97 = vsel %vm64, %v96, 0.0
    %98 = vadd.xlane.f32.xlu0 %v97
    %v99 = vpop.xlane.xlu0 %98
    %v100 = vmul.f32 %v62, %v62
    %v101 = vsel %vm64, %v100, 0.0
    %102 = vadd.xlane.f32.xlu0 %v101
    %v103 = vpop.xlane.xlu0 %102
    %vm104 = vcmask 7168
    %v105 = vsel %vm104, %v67, %v71
    %vm106 = vcmask 15360
    %v107 = vsel %vm106, %v105, %v75
    %vm108 = vcmask 23552
    %v109 = vsel %vm108, %v107, %v79
    %vm110 = vcmask 31744
    %v111 = vsel %vm110, %v109, %v83
    %vm112 = vcmask 39936
    %v113 = vsel %vm112, %v111, %v87
    %vm114 = vcmask 48128
    %v115 = vsel %vm114, %v113, %v91
    %vm116 = vcmask 56320
    %v117 = vsel %vm116, %v115, %v95
    %vm118 = vcmask 64512
    %v119 = vsel %vm118, %v117, %v99
    %vm120 = vcmask 72704
    %v121 = vsel %vm120, %v119, %v103
    %123 = vrot.lane.b32.xlu0 %v121, 32
    %v124 = vpop.permute.xlu0 %123
    %vm126 = vcmask 261120
    %v127 = vsel %vm126, %v59, %v124
    %vm128 = vcmask 336896
    %129 = vst.msk [vmem:[#allocation8] sm:$0x3] %vm128, %v127
    // Predicated region
    $region30: #{_lambda_.1} parent=1 // pred_check
      _
    $region31: #{_lambda_.1} parent=1 // pred_check_branch
      %131 = sbr.rel (0) target = $region33
    $region32: #{_lambda_.1} parent=1 // pred_region
      %133 = vsyncadd [#allocation4], 0
      %s135 = sshll.u32 [#allocation8], 4
      %s136 = int_to_ptr.vmem [resolvable:$true] %s135
      %s137 = sshll.u32 %s4, 4
      %s138 = int_to_ptr.hbm [resolvable:$true] %s137
      %140 = dma.vmem_to_hbm [thread:$0]  %s136, 32, %s138, [#allocation4]
    $region33: #{_lambda_.1} parent=1 // pred_fallthru
      _
    // Predicated region
    $region34: #{_lambda_.1} parent=1 // pred_check
      _
    $region35: #{_lambda_.1} parent=1 // pred_check_branch
      %142 = sbr.rel (0) target = $region37
    $region36: #{_lambda_.1} parent=1 // pred_region
      %144 = dma.done [#allocation4], 32
    $region37: #{_lambda_.1} parent=1 // pred_fallthru
      _
    %145 = vsyncpa [#allocation3], 1
    %146 = vsyncpa [#allocation6], 1
    %147 = vsyncpa [#allocation4], 1

</llo_original>
